<compile_context>
chip_gen: v7x
topology: tpu7x:2x2x1
jax: 0.10.0
libtpu: 0.0.40
codegen_flags: <defaults>
</compile_context>

<pallas_src>
import jax
import jax.numpy as jnp
from jax.experimental import pallas as pl
from jax.experimental.pallas import tpu as pltpu


def _round_up(n, m):
    return ((n + m - 1) // m) * m


def fnn_kernel(x_ref, w1_ref, b1_ref, w2_ref, b2_ref, o_ref):
    # fc1 on the MXU: (TM, D) bf16 @ (D, H) bf16 -> f32 accumulate.
    h = jnp.dot(x_ref[...], w1_ref[...], preferred_element_type=jnp.float32)
    # Bias + ReLU epilogue in f32 on the VPU.
    h = jnp.maximum(h + b1_ref[...], 0.0)
    # fc2 has a single output feature: VPU multiply + XLU lane reduction is cheaper
    # than an N=1 MXU matmul (1/128..1/256 of MXU output width).
    out_row = jnp.sum(h * w2_ref[...], axis=-1)[None, :] + b2_ref[...]
    # Lane-dense store: one (1, TM) row per tile (avoids TM masked 1-lane stores).
    o_ref[...] = out_row.astype(o_ref.dtype)


def fnn_forward(x, w1, b1, w2, b2, *, block_rows=512):
    """FNN forward pass:  y = relu(x @ w1 + b1) @ w2 + b2.

    x:  (B, D) float32 (or bfloat16)
    w1: (D, H)   fc1 weight, already transposed to (in_features, out_features)
    b1: (H,) / (1, H)
    w2: (H, 1)   fc2 weight, transposed
    b2: (1,) / (1, 1)
    Returns (B, 1) float32.
    """
    B, D = x.shape
    H = w1.shape[1]

    # bf16 for the streamed activation and fc1 weight: halves HBM bytes for x and
    # matches the native bf16 MXU rate; accumulation stays f32 inside the kernel.
    x_bf = x.astype(jnp.bfloat16)
    w1_bf = w1.astype(jnp.bfloat16)
    b1_f = jnp.asarray(b1, jnp.float32).reshape(1, H)
    w2_row = jnp.asarray(w2, jnp.float32).reshape(H)[None, :]   # (1, H) row for VPU fc2
    b2_f = jnp.asarray(b2, jnp.float32).reshape(1, 1)

    # Batch tiling: TM multiple of 8 (sublanes); pad B so the grid divides evenly.
    # TODO(synk): if D ever grows large, also tile the K dimension with an f32
    # VMEM accumulator (trailing "arbitrary" grid axis); unnecessary at D=16..few K.
    tm = min(block_rows, _round_up(B, 8))
    b_pad = _round_up(B, tm)
    if b_pad != B:
        x_bf = jnp.pad(x_bf, ((0, b_pad - B), (0, 0)))
    num_tiles = b_pad // tm

    out_rows = pl.pallas_call(
        fnn_kernel,
        out_shape=jax.ShapeDtypeStruct((num_tiles, tm), jnp.float32),
        grid=(num_tiles,),
        in_specs=[
            pl.BlockSpec((tm, D), lambda i: (i, 0)),   # x: streamed per batch tile
            pl.BlockSpec((D, H), lambda i: (0, 0)),    # w1: VMEM-resident
            pl.BlockSpec((1, H), lambda i: (0, 0)),    # b1: VMEM-resident
            pl.BlockSpec((1, H), lambda i: (0, 0)),    # w2 row: VMEM-resident
            pl.BlockSpec((1, 1), lambda i: (0, 0)),    # b2: VMEM-resident
        ],
        # Lane-dense output layout: one (1, TM) row per grid step.
        out_specs=pl.BlockSpec((1, tm), lambda i: (i, 0)),
        compiler_params=pltpu.CompilerParams(
            dimension_semantics=("parallel",),
        ),
    )(x_bf, w1_bf, b1_f, w2_row, b2_f)

    # Layout plumbing back to the torch-style (B, 1) column output.
    return out_rows.reshape(-1)[:B].reshape(B, 1)


def init_params(key, input_dim, hidden=64, out=1):
    """Deterministic init mimicking nn.Linear default U(-1/sqrt(fan_in), 1/sqrt(fan_in))."""
    k1, k2, k3, k4 = jax.random.split(key, 4)
    lim1 = 1.0 / jnp.sqrt(input_dim)
    lim2 = 1.0 / jnp.sqrt(hidden)
    # stored already transposed: (in_features, out_features)
    w1 = jax.random.uniform(k1, (input_dim, hidden), jnp.float32, -lim1, lim1)
    b1 = jax.random.uniform(k2, (1, hidden), jnp.float32, -lim1, lim1)
    w2 = jax.random.uniform(k3, (hidden, out), jnp.float32, -lim2, lim2)
    b2 = jax.random.uniform(k4, (1, out), jnp.float32, -lim2, lim2)
    return w1, b1, w2, b2


def fnn_reference(x, w1, b1, w2, b2):
    """JAX reference matching the kernel's bf16-matmul / f32-epilogue numerics."""
    h = jnp.dot(x.astype(jnp.bfloat16), w1.astype(jnp.bfloat16),
                preferred_element_type=jnp.float32)
    h = jnp.maximum(h + b1.reshape(1, -1), 0.0)
    return jnp.sum(h * w2.reshape(1, -1), axis=-1, keepdims=True) + b2.reshape(1, 1)


if __name__ == "__main__":
    key = jax.random.PRNGKey(0)
    kx, kp = jax.random.split(key)

    batch, input_dim = 8, 16
    x = jax.random.normal(kx, (batch, input_dim), jnp.float32)
    w1, b1, w2, b2 = init_params(kp, input_dim)

    out = fnn_forward(x, w1, b1, w2, b2)
    out = jax.block_until_ready(out)

    ref = fnn_reference(x, w1, b1, w2, b2)
    assert out.shape == (batch, 1), out.shape
    assert jnp.allclose(out, ref, atol=1e-4, rtol=1e-4), "mismatch vs JAX reference"

    print("KERNEL_OK")
</pallas_src>

<mosaic_0001>
module attributes {stable_mosaic.version = 11 : i64} {
  func.func @fnn_kernel(%arg0: i32, %arg1: memref<8x16xbf16, #tpu.memory_space<vmem>>, %arg2: memref<16x64xbf16, #tpu.memory_space<vmem>>, %arg3: memref<1x64xf32, #tpu.memory_space<vmem>>, %arg4: memref<1x64xf32, #tpu.memory_space<vmem>>, %arg5: memref<1x1xf32, #tpu.memory_space<vmem>>, %arg6: memref<1x8xf32, #tpu.memory_space<vmem>>) attributes {dimension_semantics = [#tpu.dimension_semantics<parallel>], iteration_bounds = array<i64: 1>, scalar_prefetch = 0 : i64, scratch_operands = 0 : i64, tpu.core_type = #tpu.core_type<tc>, window_params = [{transform_indices = @transform_0, window_bounds = array<i64: 8, 16>}, {pipeline_mode = #tpu.pipeline_mode<synchronous>, transform_indices = @transform_1, window_bounds = array<i64: 16, 64>}, {pipeline_mode = #tpu.pipeline_mode<synchronous>, transform_indices = @transform_2, window_bounds = array<i64: 1, 64>}, {pipeline_mode = #tpu.pipeline_mode<synchronous>, transform_indices = @transform_3, window_bounds = array<i64: 1, 64>}, {pipeline_mode = #tpu.pipeline_mode<synchronous>, transform_indices = @transform_4, window_bounds = array<i64: 1, 1>}, {transform_indices = @transform_5, window_bounds = array<i64: 1, 8>}]} {
    %c0 = arith.constant 0 : index
    %c0_0 = arith.constant 0 : index
    %0 = vector.load %arg1[%c0, %c0_0] : memref<8x16xbf16, #tpu.memory_space<vmem>>, vector<8x16xbf16>
    %c0_1 = arith.constant 0 : index
    %c0_2 = arith.constant 0 : index
    %1 = vector.load %arg2[%c0_1, %c0_2] : memref<16x64xbf16, #tpu.memory_space<vmem>>, vector<16x64xbf16>
    %cst = arith.constant dense<0.000000e+00> : vector<8x64xf32>
    %2 = tpu.matmul %0, %1, %cst {dimension_numbers = #tpu.dot_dimension_numbers<[1], [0], [0], [1], [0, 0, 1, 1], [], []>} : vector<8x16xbf16>, vector<16x64xbf16>, vector<8x64xf32> -> vector<8x64xf32>
    %c0_3 = arith.constant 0 : index
    %c0_4 = arith.constant 0 : index
    %3 = vector.load %arg3[%c0_3, %c0_4] : memref<1x64xf32, #tpu.memory_space<vmem>>, vector<1x64xf32>
    %4 = vector.broadcast %3 : vector<1x64xf32> to vector<8x64xf32>
    %5 = arith.addf %2, %4 : vector<8x64xf32>
    %cst_5 = arith.constant 0.000000e+00 : f32
    %6 = vector.broadcast %cst_5 : f32 to vector<8x64xf32>
    %7 = arith.maximumf %5, %6 : vector<8x64xf32>
    %c0_6 = arith.constant 0 : index
    %c0_7 = arith.constant 0 : index
    %8 = vector.load %arg4[%c0_6, %c0_7] : memref<1x64xf32, #tpu.memory_space<vmem>>, vector<1x64xf32>
    %9 = vector.broadcast %8 : vector<1x64xf32> to vector<8x64xf32>
    %10 = arith.mulf %7, %9 : vector<8x64xf32>
    %cst_8 = arith.constant dense<0.000000e+00> : vector<8xf32>
    %11 = vector.multi_reduction <add>, %10, %cst_8 [1] : vector<8x64xf32> to vector<8xf32>
    %12 = vector.shape_cast %11 : vector<8xf32> to vector<1x8xf32>
    %c0_9 = arith.constant 0 : index
    %c0_10 = arith.constant 0 : index
    %13 = vector.load %arg5[%c0_9, %c0_10] : memref<1x1xf32, #tpu.memory_space<vmem>>, vector<1x1xf32>
    %14 = vector.broadcast %13 : vector<1x1xf32> to vector<1x8xf32>
    %15 = arith.addf %12, %14 : vector<1x8xf32>
    %c0_11 = arith.constant 0 : index
    %c0_12 = arith.constant 0 : index
    %16 = vector.load %arg6[%c0_11, %c0_12] : memref<1x8xf32, #tpu.memory_space<vmem>>, vector<1x8xf32>
    tpu.vector_store %arg6[%c0_11, %c0_12], %15 {strides = array<i32>} : memref<1x8xf32, #tpu.memory_space<vmem>>, vector<1x8xf32>,
    return
  }
  func.func @transform_0(%arg0: i32) -> (i32, i32) {
    %c0_i32 = arith.constant 0 : i32
    %c0_i32_0 = arith.constant 0 : i32
    return %arg0, %c0_i32 : i32, i32
  }
  func.func @transform_1(%arg0: i32) -> (i32, i32) {
    %c0_i32 = arith.constant 0 : i32
    %c0_i32_0 = arith.constant 0 : i32
    %c0_i32_1 = arith.constant 0 : i32
    return %c0_i32, %c0_i32_0 : i32, i32
  }
  func.func @transform_2(%arg0: i32) -> (i32, i32) {
    %c0_i32 = arith.constant 0 : i32
    %c0_i32_0 = arith.constant 0 : i32
    %c0_i32_1 = arith.constant 0 : i32
    return %c0_i32, %c0_i32_0 : i32, i32
  }
  func.func @transform_3(%arg0: i32) -> (i32, i32) {
    %c0_i32 = arith.constant 0 : i32
    %c0_i32_0 = arith.constant 0 : i32
    %c0_i32_1 = arith.constant 0 : i32
    return %c0_i32, %c0_i32_0 : i32, i32
  }
  func.func @transform_4(%arg0: i32) -> (i32, i32) {
    %c0_i32 = arith.constant 0 : i32
    %c0_i32_0 = arith.constant 0 : i32
    %c0_i32_1 = arith.constant 0 : i32
    return %c0_i32, %c0_i32_0 : i32, i32
  }
  func.func @transform_5(%arg0: i32) -> (i32, i32) {
    %c0_i32 = arith.constant 0 : i32
    %c0_i32_0 = arith.constant 0 : i32
    return %arg0, %c0_i32 : i32, i32
  }
}

</mosaic_0001>

<llo_original>
// kernel: tpu_custom_call.1
$region0: #{tpu_custom_call.1}
  #allocation0 [shape = 'u32[]', space=smem, size = 0x4, offset = 0x4, fixed_abs, tag = 'smem constant byte address 0x4 - core index']
  #allocation1 [shape = 'u32[144,128]{1,0:T(1,128)}', space=vmem, size = 0x12000, scoped, tag = 'internal scratch']
  #allocation2 [shape = 'f32[1,1]{1,0:T(1,128)S(1)}', space=vmem, size = 0x200, scoped, tag = 'scoped memory for tpu_custom_call.1']
  %s0 = inlined_call_operand.hbm [shape: bf16[8,16], index: 0, kind: input, shape index: {}]
  %s1 = inlined_call_operand.hbm [shape: bf16[16,64], index: 1, kind: input, shape index: {}]
  %s2 = inlined_call_operand.vmem [shape: f32[1,64], index: 2, kind: input, shape index: {}]
  %s3 = inlined_call_operand.vmem [shape: f32[1,64], index: 3, kind: input, shape index: {}]
  %s4 = inlined_call_operand.<no memory space> [shape: f32[1,1], index: 4, kind: input, shape index: {}]
  %s5 = inlined_call_operand.hbm [shape: f32[1,8], index: 5, kind: output, shape index: {}]
  %s6 = sld [smem:[#allocation0]]
  $region38: #{tpu_custom_call.1} parent=0
    _
  %s8 = ssub.s32 1, %s6
  %s9 = scalar_select 0, %s8, %s6
  %v10 = vstv %s4
  %11 = vst [vmem:[#allocation2] sm:$0x1] %v10
  $region1: #{tpu_custom_call.1} parent=0
    #allocation3 [shape = 'u8[2048]{0}', space=vmem, size = 0x800, scoped, tag = 'input window, operand 0, single buffered']
    #allocation4 [shape = 's32[1]{0}', space=sflag, size = 0x4, scoped, tag = 'scoped memory for tpu_custom_call.1']
    #allocation5 [shape = 's32[1]{0}', space=sflag, size = 0x4, scoped, tag = 'scoped memory for tpu_custom_call.1']
    #allocation6 [shape = 'u8[4096]{0}', space=vmem, size = 0x1000, scoped, tag = 'input window, operand 1, single buffered']
    #allocation7 [shape = 's32[1]{0}', space=sflag, size = 0x4, scoped, tag = 'scoped memory for tpu_custom_call.1']
    #allocation8 [shape = 'u8[512]{0}', space=vmem, size = 0x400, scoped, tag = 'output window, operand 0, single buffered']
    %12 = vsyncpa [#allocation4], 0
    %13 = vsyncpa [#allocation7], 0
    %14 = vsyncpa [#allocation5], 0
    // Predicated region
    $region2: #{tpu_custom_call.1} parent=1 // pred_check
      _
    $region3: #{tpu_custom_call.1} parent=1 // pred_check_branch
      %16 = sbr.rel (0) target = $region5
    $region4: #{tpu_custom_call.1} parent=1 // pred_region
      %s18 = ssub.s32 64, 64
      %19 = vsyncadd [#allocation4], %s18
      %s21 = sshll.u32 [#allocation3], 4
      %s22 = int_to_ptr.vmem [resolvable:$true] %s21
      %24 = dma.hbm_to_vmem [thread:$0]  %s0, 64, %s22, [#allocation4]
    $region5: #{tpu_custom_call.1} parent=1 // pred_fallthru
      _
    // Predicated region
    $region6: #{tpu_custom_call.1} parent=1 // pred_check
      _
    $region7: #{tpu_custom_call.1} parent=1 // pred_check_branch
      %26 = sbr.rel (0) target = $region9
    $region8: #{tpu_custom_call.1} parent=1 // pred_region
      %s28 = ssub.s32 128, 128
      %29 = vsyncadd [#allocation7], %s28
      %s30 = sshll.u32 [#allocation6], 4
      %s31 = int_to_ptr.vmem [resolvable:$true] %s30
      %36 = dma.hbm_to_vmem [thread:$0]  %s1, 128, %s31, [#allocation7], 64, 64, 4
    $region9: #{tpu_custom_call.1} parent=1 // pred_fallthru
      _
    // Predicated region
    $region10: #{tpu_custom_call.1} parent=1 // pred_check
      _
    $region11: #{tpu_custom_call.1} parent=1 // pred_check_branch
      %38 = sbr.rel (0) target = $region13
    $region12: #{tpu_custom_call.1} parent=1 // pred_region
      _
    $region13: #{tpu_custom_call.1} parent=1 // pred_fallthru
      _
    // Predicated region
    $region14: #{tpu_custom_call.1} parent=1 // pred_check
      _
    $region15: #{tpu_custom_call.1} parent=1 // pred_check_branch
      %40 = sbr.rel (0) target = $region17
    $region16: #{tpu_custom_call.1} parent=1 // pred_region
      _
    $region17: #{tpu_custom_call.1} parent=1 // pred_fallthru
      _
    // Predicated region
    $region18: #{tpu_custom_call.1} parent=1 // pred_check
      _
    $region19: #{tpu_custom_call.1} parent=1 // pred_check_branch
      %42 = sbr.rel (0) target = $region21
    $region20: #{tpu_custom_call.1} parent=1 // pred_region
      _
    $region21: #{tpu_custom_call.1} parent=1 // pred_fallthru
      _
    // Predicated region
    $region22: #{tpu_custom_call.1} parent=1 // pred_check
      _
    $region23: #{tpu_custom_call.1} parent=1 // pred_check_branch
      %44 = sbr.rel (0) target = $region25
    $region24: #{tpu_custom_call.1} parent=1 // pred_region
      %45 = dma.done [#allocation4], 64
    $region25: #{tpu_custom_call.1} parent=1 // pred_fallthru
      _
    // Predicated region
    $region26: #{tpu_custom_call.1} parent=1 // pred_check
      _
    $region27: #{tpu_custom_call.1} parent=1 // pred_check_branch
      %47 = sbr.rel (0) target = $region29
    $region28: #{tpu_custom_call.1} parent=1 // pred_region
      %48 = dma.done [#allocation7], 128
    $region29: #{tpu_custom_call.1} parent=1 // pred_fallthru
      _
    %v50 = vld [vmem:[#allocation3] sm:$0xf]
    %v51 = vld [vmem:[#allocation6] sm:$0xf]
    %v52 = vld [vmem:[#allocation6 + $0x4] sm:$0xf]
    %v53 = vld [vmem:[%s2] sm:$0x1]
    %v55 = vlaneseq
    %v56 = vshrl.u32 %v55, 7
    %v57 = vsub.s32 0, %v56
    %v58 = vrot.slane %v53, %v57
    %v62 = vunpack.c.l.b16 %v51
    %v63 = vunpack.c.l.b16 %v52
    %v64 = vpack.c.b16 %v63, %v62
    %vm66 = vcmask 130048
    %v68 = vsel %vm66, %v50, 0
    %70 = vmatprep.subr.bf16.mxu0 0
    %71 = vmatpush1.bf16.msra.mxu0 %v64
    %72 = vmatprep.subr.bf16.mxu0 0
    %73 = vmatpush1.bf16.msra.mxu0 0
    %74 = vmatprep.subr.bf16.mxu0 0
    %75 = vmatpush1.bf16.msra.mxu0 0
    %76 = vmatprep.subr.bf16.mxu0 0
    %77 = vmatpush1.bf16.msra.mxu0 0
    %78 = vmatprep.subr.bf16.mxu0 0
    %79 = vmatpush1.bf16.msra.mxu0 0
    %80 = vmatprep.subr.bf16.mxu0 0
    %81 = vmatpush1.bf16.msra.mxu0 0
    %82 = vmatprep.subr.bf16.mxu0 0
    %83 = vmatpush1.bf16.msra.mxu0 0
    %84 = vmatprep.subr.bf16.mxu0 0
    %85 = vmatpush1.bf16.msra.mxu0 0
    %86 = vmatprep.subr.bf16.mxu0 0
    %87 = vmatpush1.bf16.msra.mxu0 0
    %88 = vmatprep.subr.bf16.mxu0 0
    %89 = vmatpush1.bf16.msra.mxu0 0
    %90 = vmatprep.subr.bf16.mxu0 0
    %91 = vmatpush1.bf16.msra.mxu0 0
    %92 = vmatprep.subr.bf16.mxu0 0
    %93 = vmatpush1.bf16.msra.mxu0 0
    %94 = vmatprep.subr.bf16.mxu0 0
    %95 = vmatpush1.bf16.msra.mxu0 0
    %96 = vmatprep.subr.bf16.mxu0 0
    %97 = vmatpush1.bf16.msra.mxu0 0
    %98 = vmatprep.subr.bf16.mxu0 0
    %99 = vmatpush1.bf16.msra.mxu0 0
    %100 = vmatprep.subr.bf16.mxu0 0
    %101 = vmatpush1.bf16.msra.mxu0 0
    %102 = vmatprep.mubr.bf16.mxu0 0
    %103 = vmatmul.mubr.bf16.gmra.mrb[0].mxu0 %v68
    %v104 = vpop.f32.mrb[0].mxu0
    %v105 = vadd.f32 %v58, %v104
    %v106 = vpop.f32.mrb[0].mxu0
    %v107 = vpop.f32.mrb[0].mxu0
    %v108 = vpop.f32.mrb[0].mxu0
    %109 = vdwg.mxu0
    %v110 = vmax.f32 %v105, 0.0
    %v111 = vld [vmem:[%s3] sm:$0x1]
    %v113 = vlaneseq
    %v114 = vshrl.u32 %v113, 7
    %v115 = vsub.s32 0, %v114
    %v116 = vrot.slane %v111, %v115
    %v118 = vmul.f32 %v110, %v116
    %vm119 = vcmask 523264
    %v120 = vsel %vm119, %v118, 0.0
    %121 = vadd.xlane.f32.xlu0 %v120
    %v122 = vpop.xlane.xlu0 %121
    %v123 = vld [vmem:[#allocation2] sm:$0x1]
    %125 = vset.pattern.permute.xlu0 0
    %126 = vperm.xlu0 %125, %v123
    %v127 = vpop.permute.xlu0 %126
    %v129 = vlaneseq
    %v130 = vshrl.u32 %v129, 7
    %v131 = vsub.s32 0, %v130
    %v132 = vrot.slane %v127, %v131
    %v133 = vadd.f32 %v122, %v132
    %v135 = vlaneseq
    %v136 = vand.u32 %v135, 127
    %v137 = vlaneseq
    %v138 = vshrl.u32 %v137, 7
    %v139 = vsub.s32 %v136, %v138
    %v140 = vrot.slane %v133, %v139
    %vm142 = vcmask 57344
    %143 = vst.msk [vmem:[#allocation8] sm:$0x1] %vm142, %v140
    // Predicated region
    $region30: #{tpu_custom_call.1} parent=1 // pred_check
      _
    $region31: #{tpu_custom_call.1} parent=1 // pred_check_branch
      %145 = sbr.rel (0) target = $region33
    $region32: #{tpu_custom_call.1} parent=1 // pred_region
      %s147 = ssub.s32 16, 16
      %148 = vsyncadd [#allocation5], %s147
      %s150 = sshll.u32 [#allocation8], 4
      %s151 = int_to_ptr.vmem [resolvable:$true] %s150
      %153 = dma.vmem_to_hbm [thread:$0]  %s151, 16, %s5, [#allocation5]
    $region33: #{tpu_custom_call.1} parent=1 // pred_fallthru
      _
    // Predicated region
    $region34: #{tpu_custom_call.1} parent=1 // pred_check
      _
    $region35: #{tpu_custom_call.1} parent=1 // pred_check_branch
      %155 = sbr.rel (0) target = $region37
    $region36: #{tpu_custom_call.1} parent=1 // pred_region
      %156 = dma.done [#allocation5], 16
    $region37: #{tpu_custom_call.1} parent=1 // pred_fallthru
      _
    %157 = vsyncpa [#allocation4], 1
    %158 = vsyncpa [#allocation7], 1
    %159 = vsyncpa [#allocation5], 1

</llo_original>
